<compile_context>
chip_gen: v6e
topology: v6e:2x2x1
jax: 0.10.0
libtpu: 0.0.40
codegen_flags: <defaults>
</compile_context>

<pallas_src>
import math
from functools import partial

import jax
import jax.numpy as jnp
from jax.experimental import pallas as pl
from jax.experimental.pallas import tpu as pltpu

_SUB = 8  # row-block granularity (sublane multiple)


def _act(name, x):
    if name == "Sigmoid":
        return jax.nn.sigmoid(x)
    if name == "ReLU":
        return jnp.maximum(x, 0.0)
    if name == "SiLU":
        return jax.nn.silu(x)
    if name == "GELU":
        # PyTorch nn.GELU() default is the exact (erf) formulation.
        return jax.nn.gelu(x, approximate=False)
    raise ValueError(f"activation={name}")


# ---------------------------------------------------------------------------
# Kernels
# ---------------------------------------------------------------------------

def _glu_rows_kernel(a_ref, b_ref, o_ref, *, activation, nb_bypass, compute_dtype):
    """Dense path. Blocks are (row_block, L) slabs of the flattened view.

    a_ref: rows that are either bypass rows (copied) or the gate's "A" rows.
    b_ref: the matching "B" rows (same rows shifted by n_ab*HW elements).
    Bypass and gated blocks never straddle (row_block divides n_x*HW/L), so a
    cheap pl.when on the block index selects the branch.
    """

    def _gated():
        a = a_ref[...].astype(compute_dtype)
        b = b_ref[...].astype(compute_dtype)
        return (a * _act(activation, b)).astype(o_ref.dtype)

    if nb_bypass == 0:
        o_ref[...] = _gated()
    else:
        j = pl.program_id(1)

        @pl.when(j < nb_bypass)
        def _():
            o_ref[...] = a_ref[...]

        @pl.when(j >= nb_bypass)
        def _():
            o_ref[...] = _gated()


def _glu_channels_kernel(x_ref, o_ref, *, activation, n_x, n_ab, compute_dtype):
    """Fallback path: one (C, tile_hw) block; A/B sliced on the channel axis."""
    x = x_ref[...]
    a = x[n_x:n_x + n_ab].astype(compute_dtype)
    b = x[n_x + n_ab:n_x + 2 * n_ab].astype(compute_dtype)
    gated = (a * _act(activation, b)).astype(o_ref.dtype)
    if n_x == 0:
        o_ref[...] = gated
    else:
        o_ref[0:n_x, :] = x[0:n_x]
        o_ref[n_x:n_x + n_ab, :] = gated


# ---------------------------------------------------------------------------
# Planning helpers
# ---------------------------------------------------------------------------

def _device_params():
    """(legacy_generation, target_block_bytes, vmem_limit_bytes)."""
    try:
        kind = jax.devices()[0].device_kind.lower()
    except Exception:  # pragma: no cover - conservative default
        kind = ""
    legacy = any(t in kind for t in ("v2", "v3", "v4", "v5"))
    big_vmem = any(t in kind for t in ("v2", "v3", "v4", "v5", "v6"))
    target_block = (4 if big_vmem else 2) * 2**20   # per-block bytes target
    vmem_limit = (64 if big_vmem else 32) * 2**20   # scoped VMEM request
    return legacy, target_block, vmem_limit


def _dense_plan(n_batch, n_x, n_ab, hw, itemsize, target_block_bytes):
    """Pick (lane_width L, row_block R) for the flattened (rows, L) layout.

    Constraints: L | hw, L % 128 == 0, R % 8 == 0, and R divides
    gcd(c_out, n_ab) * (hw // L) so every A/B/bypass block offset lands on a
    block boundary (no partial / straddling blocks).  Returns None if no
    feasible plan exists (caller uses the channel-axis fallback).
    """
    if hw % 128 != 0:
        return None
    c_out = n_x + n_ab
    g = math.gcd(c_out, n_ab)
    for lane in range(min(hw, 512), 0, -128):
        if hw % lane:
            continue
        rpc = hw // lane               # rows per channel
        big_g = g * rpc                # any row block must divide this
        if big_g % _SUB:
            continue
        cap = max(_SUB, (target_block_bytes // (lane * itemsize)) // _SUB * _SUB)
        r_blk = None
        d = (min(big_g, cap) // _SUB) * _SUB
        while d >= _SUB:
            if big_g % d == 0:
                r_blk = d
                break
            d -= _SUB
        if r_blk is None:
            continue
        # Keep >= 2 grid steps so dual-TC chips (v7x) can shard the work.
        rows_out = c_out * rpc
        if n_batch * (rows_out // r_blk) < 2:
            d = r_blk - _SUB
            while d >= _SUB:
                if big_g % d == 0 and n_batch * (rows_out // d) >= 2:
                    r_blk = d
                    break
                d -= _SUB
        return lane, r_blk
    return None


def _fallback_tile(n_batch, hw, c, itemsize, target_block_bytes):
    """Lane-dense spatial tile for the channel-axis fallback path."""
    if hw % 128 != 0:
        return hw  # full extent (only reachable if padding was skipped)
    max_lanes = max(128, (target_block_bytes // max(1, c * itemsize)) // 128 * 128)
    t = max(128, (min(hw, max_lanes) // 128) * 128)
    while t > 128 and hw % t:
        t -= 128
    # Cheap extra parallelism for dual-TC chips.
    while n_batch * (hw // t) < 2 and t >= 256 and t % 256 == 0:
        t //= 2
    return t


# ---------------------------------------------------------------------------
# Public wrapper
# ---------------------------------------------------------------------------

def activation_glu(x, activation="Sigmoid", bypass_channels=0):
    """GLU-style gated activation on an NCHW tensor via a Pallas TPU kernel."""
    assert activation in ("Sigmoid", "ReLU", "SiLU", "GELU"), f"activation={activation}"
    assert x.ndim == 4, "expected NCHW input"
    n, c, h, w = x.shape
    n_x = int(bypass_channels)
    n_ab = (c - n_x) // 2
    assert n_ab >= 1 and n_x + 2 * n_ab == c, "channel count must allow an even A/B split"
    c_out = n_x + n_ab
    hw = h * w
    itemsize = jnp.dtype(x.dtype).itemsize

    legacy, target_block, vmem_limit = _device_params()
    compute_dtype = (jnp.bfloat16
                     if (x.dtype == jnp.bfloat16 and not legacy) else jnp.float32)

    # Pad H*W up to a multiple of 128 (rare; keeps lane-dense, bounded tiles).
    hw_p = hw if hw % 128 == 0 else ((hw + 127) // 128) * 128
    xr = x.reshape(n, c, hw)
    if hw_p != hw:
        xr = jnp.pad(xr, ((0, 0), (0, 0), (0, hw_p - hw)))

    compiler_params = pltpu.CompilerParams(
        dimension_semantics=("parallel", "parallel"),
        vmem_limit_bytes=int(vmem_limit),
    )

    plan = _dense_plan(n, n_x, n_ab, hw_p, itemsize, target_block)

    if plan is not None:
        lane, r_blk = plan
        rpc = hw_p // lane                     # rows per channel
        rows_in, rows_out = c * rpc, c_out * rpc
        nb_total = rows_out // r_blk
        nb_bypass = (n_x * rpc) // r_blk       # exact (r_blk | n_x*rpc)
        b_off = (n_ab * rpc) // r_blk          # exact (r_blk | n_ab*rpc)

        x3 = xr.reshape(n, rows_in, lane)      # free reshape
        kernel = partial(_glu_rows_kernel, activation=activation,
                         nb_bypass=nb_bypass, compute_dtype=compute_dtype)
        out = pl.pallas_call(
            kernel,
            out_shape=jax.ShapeDtypeStruct((n, rows_out, lane), x.dtype),
            grid=(n, nb_total),
            in_specs=[
                pl.BlockSpec((None, r_blk, lane), lambda i, j: (i, j, 0)),
                pl.BlockSpec((None, r_blk, lane),
                             lambda i, j, _o=b_off: (i, j + _o, 0)),
            ],
            out_specs=pl.BlockSpec((None, r_blk, lane), lambda i, j: (i, j, 0)),
            compiler_params=compiler_params,
        )(x3, x3)                              # same HBM buffer, two views
        out = out.reshape(n, c_out, hw_p)
    else:
        tile = _fallback_tile(n, hw_p, c, itemsize, target_block)
        kernel = partial(_glu_channels_kernel, activation=activation,
                         n_x=n_x, n_ab=n_ab, compute_dtype=compute_dtype)
        out = pl.pallas_call(
            kernel,
            out_shape=jax.ShapeDtypeStruct((n, c_out, hw_p), x.dtype),
            grid=(n, hw_p // tile),
            in_specs=[pl.BlockSpec((None, c, tile), lambda i, j: (i, 0, j))],
            out_specs=pl.BlockSpec((None, c_out, tile), lambda i, j: (i, 0, j)),
            compiler_params=compiler_params,
        )(xr)

    if hw_p != hw:
        out = out[:, :, :hw]
    return out.reshape(n, c_out, h, w)


# ---------------------------------------------------------------------------
# Reference + tests
# ---------------------------------------------------------------------------

def _reference(x, activation="Sigmoid", bypass_channels=0):
    x32 = x.astype(jnp.float32)
    n_x = bypass_channels
    c = x.shape[1]
    n_ab = (c - n_x) // 2
    a = x32[:, n_x:n_x + n_ab]
    b = x32[:, n_x + n_ab:]
    gated = a * _act(activation, b)
    if n_x == 0:
        return gated
    return jnp.concatenate([x32[:, :n_x], gated], axis=1)


if __name__ == "__main__":
    key = jax.random.PRNGKey(0)

    # Case 1: default Activation() -> Sigmoid gate, no bypass (dense path).
    x1 = jax.random.normal(key, (2, 8, 16, 16), dtype=jnp.float32)
    out1 = jax.block_until_ready(activation_glu(x1, "Sigmoid", bypass_channels=0))
    ref1 = _reference(x1, "Sigmoid", bypass_channels=0)
    assert out1.shape == (2, 4, 16, 16), out1.shape
    assert jnp.allclose(out1, ref1, atol=1e-6, rtol=1e-6)

    # Case 2: SiLU gate with 2 bypass channels (channel-axis fallback path).
    x2 = jax.random.normal(jax.random.fold_in(key, 1), (2, 10, 16, 16), dtype=jnp.float32)
    out2 = jax.block_until_ready(activation_glu(x2, "SiLU", bypass_channels=2))
    ref2 = _reference(x2, "SiLU", bypass_channels=2)
    assert out2.shape == (2, 6, 16, 16), out2.shape
    assert jnp.allclose(out2, ref2, atol=1e-6, rtol=1e-6)

    # Case 3: GELU gate, bf16 input (dense path, bf16/f32 in-kernel math).
    x3 = jax.random.normal(jax.random.fold_in(key, 2), (1, 6, 32, 32), dtype=jnp.bfloat16)
    out3 = jax.block_until_ready(activation_glu(x3, "GELU", bypass_channels=0))
    ref3 = _reference(x3, "GELU", bypass_channels=0)
    assert out3.shape == (1, 3, 32, 32), out3.shape
    assert jnp.allclose(out3.astype(jnp.float32), ref3, atol=4e-2, rtol=4e-2)

    # Case 4: ReLU gate with 4 bypass channels (dense path incl. bypass blocks).
    x4 = jax.random.normal(jax.random.fold_in(key, 3), (2, 12, 16, 16), dtype=jnp.float32)
    out4 = jax.block_until_ready(activation_glu(x4, "ReLU", bypass_channels=4))
    ref4 = _reference(x4, "ReLU", bypass_channels=4)
    assert out4.shape == (2, 8, 16, 16), out4.shape
    assert jnp.allclose(out4, ref4, atol=1e-6, rtol=1e-6)

    print("KERNEL_OK")
</pallas_src>

<mosaic_0001>
module attributes {stable_mosaic.version = 11 : i64} {
  func.func @_glu_rows_kernel(%arg0: i32, %arg1: i32, %arg2: memref<1x8x128xf32, #tpu.memory_space<vmem>>, %arg3: memref<1x8x128xf32, #tpu.memory_space<vmem>>, %arg4: memref<1x8x128xf32, #tpu.memory_space<vmem>>) attributes {dimension_semantics = [#tpu.dimension_semantics<parallel>, #tpu.dimension_semantics<parallel>], iteration_bounds = array<i64: 2, 1>, scalar_prefetch = 0 : i64, scratch_operands = 0 : i64, tpu.core_type = #tpu.core_type<tc>, window_params = [{transform_indices = @transform_0, window_bounds = array<i64: 1, 8, 128>}, {transform_indices = @transform_1, window_bounds = array<i64: 1, 8, 128>}, {transform_indices = @transform_2, window_bounds = array<i64: 1, 8, 128>}]} {
    %c0 = arith.constant 0 : index
    %c0_0 = arith.constant 0 : index
    %c0_1 = arith.constant 0 : index
    %0 = vector.load %arg2[%c0, %c0_0, %c0_1] : memref<1x8x128xf32, #tpu.memory_space<vmem>>, vector<1x8x128xf32>
    %1 = vector.shape_cast %0 : vector<1x8x128xf32> to vector<8x128xf32>
    %c0_2 = arith.constant 0 : index
    %c0_3 = arith.constant 0 : index
    %c0_4 = arith.constant 0 : index
    %2 = vector.load %arg3[%c0_2, %c0_3, %c0_4] : memref<1x8x128xf32, #tpu.memory_space<vmem>>, vector<1x8x128xf32>
    %3 = vector.shape_cast %2 : vector<1x8x128xf32> to vector<8x128xf32>
    %4 = arith.negf %3 : vector<8x128xf32>
    %5 = math.exp %4 : vector<8x128xf32>
    %cst = arith.constant 1.000000e+00 : f32
    %6 = vector.broadcast %cst : f32 to vector<8x128xf32>
    %7 = arith.addf %6, %5 : vector<8x128xf32>
    %8 = arith.divf %6, %7 : vector<8x128xf32>
    %9 = arith.mulf %1, %8 : vector<8x128xf32>
    %c0_5 = arith.constant 0 : index
    %c0_6 = arith.constant 0 : index
    %c0_7 = arith.constant 0 : index
    %10 = vector.load %arg4[%c0_5, %c0_6, %c0_7] : memref<1x8x128xf32, #tpu.memory_space<vmem>>, vector<1x8x128xf32>
    %11 = vector.shape_cast %10 : vector<1x8x128xf32> to vector<8x128xf32>
    %12 = vector.shape_cast %9 : vector<8x128xf32> to vector<1x8x128xf32>
    tpu.vector_store %arg4[%c0_5, %c0_6, %c0_7], %12 {strides = array<i32>} : memref<1x8x128xf32, #tpu.memory_space<vmem>>, vector<1x8x128xf32>,
    return
  }
  func.func @transform_0(%arg0: i32, %arg1: i32) -> (i32, i32, i32) {
    %c0_i32 = arith.constant 0 : i32
    %c0_i32_0 = arith.constant 0 : i32
    return %arg0, %arg1, %c0_i32 : i32, i32, i32
  }
  func.func @transform_1(%arg0: i32, %arg1: i32) -> (i32, i32, i32) {
    %c1_i32 = arith.constant 1 : i32
    %0 = arith.addi %arg1, %c1_i32 : i32
    %c0_i32 = arith.constant 0 : i32
    %c0_i32_0 = arith.constant 0 : i32
    return %arg0, %0, %c0_i32 : i32, i32, i32
  }
  func.func @transform_2(%arg0: i32, %arg1: i32) -> (i32, i32, i32) {
    %c0_i32 = arith.constant 0 : i32
    %c0_i32_0 = arith.constant 0 : i32
    return %arg0, %arg1, %c0_i32 : i32, i32, i32
  }
}

</mosaic_0001>

<llo_original>
// kernel: tpu_custom_call.1
$region0: #{tpu_custom_call.1}
  #allocation0 [shape = 'u32[]', space=smem, size = 0x4, offset = 0x4, fixed_abs, tag = 'smem constant byte address 0x4 - core index']
  #allocation1 [shape = 'u32[144,128]{1,0:T(1,128)}', space=vmem, size = 0x12000, scoped, tag = 'internal scratch']
  %s0 = inlined_call_operand.hbm [shape: f32[2,16,128], index: 0, kind: input, shape index: {}]
  %s1 = inlined_call_operand.hbm [shape: f32[2,16,128], index: 1, kind: input, shape index: {}]
  %s2 = inlined_call_operand.hbm [shape: f32[2,8,128], index: 2, kind: output, shape index: {}]
  %s3 = sld [smem:[#allocation0]]
  $region49: #{tpu_custom_call.1} parent=0
    _
  %s5 = ssub.s32 1, %s3
  %s6 = scalar_select 0, %s5, %s3
  $region1: #{tpu_custom_call.1} parent=0
    #allocation2 [shape = 'u8[8192]{0}', space=vmem, size = 0x2000, scoped, tag = 'input window, operand 0']
    #allocation3 [shape = 's32[2]{0}', space=sflag, size = 0x8, scoped, tag = 'scoped memory for tpu_custom_call.1']
    #allocation4 [shape = 's32[2]{0}', space=sflag, size = 0x8, scoped, tag = 'scoped memory for tpu_custom_call.1']
    #allocation5 [shape = 'u8[8192]{0}', space=vmem, size = 0x2000, scoped, tag = 'input window, operand 1']
    #allocation6 [shape = 's32[2]{0}', space=sflag, size = 0x8, scoped, tag = 'scoped memory for tpu_custom_call.1']
    #allocation7 [shape = 'u8[8192]{0}', space=vmem, size = 0x2000, scoped, tag = 'output window, operand 0']
    %7 = vsyncpa [#allocation3], 0
    %s8 = scalar_lea.sflag [#allocation3], 1
    %9 = vsyncpa %s8, 0
    %10 = vsyncpa [#allocation6], 0
    %s11 = scalar_lea.sflag [#allocation6], 1
    %12 = vsyncpa %s11, 0
    %13 = vsyncpa [#allocation4], 0
    %s14 = scalar_lea.sflag [#allocation4], 1
    %15 = vsyncpa %s14, 0
    loop: start=0, step=1, limit=4
    $region2: #{tpu_custom_call.1} parent=1 // loop_pre_header
      _
    $region3: #{tpu_custom_call.1} parent=1 // loop_header
      %s17 = sphi 0, %s21
      %p18 = scmp.ge.s32.totalorder %s17, 4
      %s24 = sphi 0, %s36
      %s25 = sphi 0, %s32
      %s26 = sphi 0, %s24
      %s27 = sphi 0, %s25
      %s28 = sphi 0, %s26
      %s29 = sphi 0, %s27
      %s41 = sphi 0, %s43
      %s44 = sphi 0, %s41
      %s45 = sphi 0, %s44
      %s61 = sphi 0, %s45
      %s71 = sphi 0, %s73
      %s74 = sphi 0, %s71
      %s75 = sphi 0, %s74
      %s91 = sphi 0, %s75
      %s99 = sphi 0, %s101
      %s102 = sphi 0, %s99
      %s103 = sphi 0, %s102
      %s119 = sphi 0, %s103
    $region4: #{tpu_custom_call.1} parent=1 // loop_header_branch
      %20 = sbr.rel (%p18) target = $region8
    $region5: #{tpu_custom_call.1} parent=1 // loop_body
      %s22 = ssub.s32 %s17, 1
      %s23 = ssub.s32 %s17, 2
      %s30 = sadd.s32 1, %s25
      %p31 = scmp.ge.s32.totalorder %s30, 1
      %s32 = scalar_select %p31, 0, %s30
      %s33 = sadd.s32 1, %s24
      %s34 = scalar_select %p31, %s33, %s24
      %p35 = scmp.ge.s32.totalorder %s34, 2
      %s36 = scalar_select %p35, 0, %s34
      %s37 = ssub.s32 %s24, %s36
      %s38 = ssub.s32 %s25, %s32
      %s39 = sor.u32 %s37, %s38
      %p40 = scmp.eq.s32.totalorder %s39, 0
      %s42 = sadd.s32 %s41, 1
      %s43 = scalar_select %p40, %s41, %s42
      %p46 = pneg %p40
      %p47 = scmp.eq.s32.totalorder %s17, 1
      %p48 = por %p46, %p47
      %p49 = scmp.ne.s32.totalorder %s41, %s44
      %p50 = scmp.eq.s32.totalorder %s17, 0
      %p51 = por %p49, %p50
      %p52 = scmp.ne.s32.totalorder %s41, %s44
      %p53 = scmp.eq.s32.totalorder %s22, 1
      %p54 = por %p52, %p53
      %p55 = scmp.ne.s32.totalorder %s44, %s45
      %p56 = scmp.eq.s32.totalorder %s22, 0
      %p57 = por %p55, %p56
      %p58 = scmp.ne.s32.totalorder %s44, %s45
      %p59 = scmp.eq.s32.totalorder %s23, 1
      %p60 = por %p58, %p59
      %p62 = scmp.ne.s32.totalorder %s45, %s61
      %p63 = scmp.eq.s32.totalorder %s23, 0
      %p64 = por %p62, %p63
      %s65 = sadd.s32 %s25, 1
      %s66 = sadd.s32 %s32, 1
      %s67 = ssub.s32 %s24, %s36
      %s68 = ssub.s32 %s65, %s66
      %s69 = sor.u32 %s67, %s68
      %p70 = scmp.eq.s32.totalorder %s69, 0
      %s72 = sadd.s32 %s71, 1
      %s73 = scalar_select %p70, %s71, %s72
      %p76 = pneg %p70
      %p77 = scmp.eq.s32.totalorder %s17, 1
      %p78 = por %p76, %p77
      %p79 = scmp.ne.s32.totalorder %s71, %s74
      %p80 = scmp.eq.s32.totalorder %s17, 0
      %p81 = por %p79, %p80
      %p82 = scmp.ne.s32.totalorder %s71, %s74
      %p83 = scmp.eq.s32.totalorder %s22, 1
      %p84 = por %p82, %p83
      %p85 = scmp.ne.s32.totalorder %s74, %s75
      %p86 = scmp.eq.s32.totalorder %s22, 0
      %p87 = por %p85, %p86
      %p88 = scmp.ne.s32.totalorder %s74, %s75
      %p89 = scmp.eq.s32.totalorder %s23, 1
      %p90 = por %p88, %p89
      %p92 = scmp.ne.s32.totalorder %s75, %s91
      %p93 = scmp.eq.s32.totalorder %s23, 0
      %p94 = por %p92, %p93
      %s95 = ssub.s32 %s24, %s36
      %s96 = ssub.s32 %s25, %s32
      %s97 = sor.u32 %s95, %s96
      %p98 = scmp.eq.s32.totalorder %s97, 0
      %s100 = sadd.s32 %s99, 1
      %s101 = scalar_select %p98, %s99, %s100
      %p104 = pneg %p98
      %p105 = scmp.eq.s32.totalorder %s17, 1
      %p106 = por %p104, %p105
      %p107 = scmp.ne.s32.totalorder %s99, %s102
      %p108 = scmp.eq.s32.totalorder %s17, 0
      %p109 = por %p107, %p108
      %p110 = scmp.ne.s32.totalorder %s99, %s102
      %p111 = scmp.eq.s32.totalorder %s22, 1
      %p112 = por %p110, %p111
      %p113 = scmp.ne.s32.totalorder %s102, %s103
      %p114 = scmp.eq.s32.totalorder %s22, 0
      %p115 = por %p113, %p114
      %p116 = scmp.ne.s32.totalorder %s102, %s103
      %p117 = scmp.eq.s32.totalorder %s23, 1
      %p118 = por %p116, %p117
      %p120 = scmp.ne.s32.totalorder %s103, %s119
      %p121 = scmp.eq.s32.totalorder %s23, 0
      %p122 = por %p120, %p121
      %p123 = scmp.le.s32.totalorder 1, %s17
      %p124 = scmp.lt.s32.totalorder %s17, 3
      %p125 = pnand %p123, %p124
      %p126 = pneg %p125
      // Predicated region
      $region9: #{tpu_custom_call.1} parent=5 // pred_check
        _
      $region10: #{tpu_custom_call.1} parent=5 // pred_check_branch
        %128 = sbr.rel (%p125) target = $region12
      $region11: #{tpu_custom_call.1} parent=5 // pred_region
        %s129 = ssub.s32 %s17, 1
      $region12: #{tpu_custom_call.1} parent=5 // pred_fallthru
        _
      %p130 = scmp.lt.s32.totalorder %s17, 2
      // Predicated region
      $region13: #{tpu_custom_call.1} parent=5 // pred_check
        %p131 = pneg %p130
      $region14: #{tpu_custom_call.1} parent=5 // pred_check_branch
        %133 = sbr.rel (%p131) target = $region16
      $region15: #{tpu_custom_call.1} parent=5 // pred_region
        // Predicated region
        $region17: #{tpu_custom_call.1} parent=15 // pred_check
          %p134 = pneg %p51
        $region18: #{tpu_custom_call.1} parent=15 // pred_check_branch
          %136 = sbr.rel (%p134) target = $region20
        $region19: #{tpu_custom_call.1} parent=15 // pred_region
          %s137 = sand.u32 %s41, 1
          %s138 = scalar_lea.sflag [#allocation3], %s137
          %s139 = sand.u32 %s41, 1
          %s140 = smul.addr %s139, 8
          %s141 = scalar_lea.vmem [#allocation2], %s140
          %s143 = ssub.s32 128, 128
          %144 = vsyncadd %s138, %s143
          %s145 = smul.addr %s24, 2
          %s146 = sadd.s32 %s25, %s145
          %s147 = smul.addr %s146, 128
          %s148 = scalar_lea.hbm %s0, %s147
          %s150 = sshll.u32 %s141, 4
          %s151 = int_to_ptr.vmem [resolvable:$true] %s150
          %153 = dma.hbm_to_vmem [thread:$0]  %s148, 128, %s151, %s138
        $region20: #{tpu_custom_call.1} parent=15 // pred_fallthru
          _
        // Predicated region
        $region21: #{tpu_custom_call.1} parent=15 // pred_check
          %p154 = pneg %p81
        $region22: #{tpu_custom_call.1} parent=15 // pred_check_branch
          %156 = sbr.rel (%p154) target = $region24
        $region23: #{tpu_custom_call.1} parent=15 // pred_region
          %s157 = sand.u32 %s71, 1
          %s158 = scalar_lea.sflag [#allocation6], %s157
          %s159 = sand.u32 %s71, 1
          %s160 = smul.addr %s159, 8
          %s161 = scalar_lea.vmem [#allocation5], %s160
          %s162 = sadd.s32 %s25, 1
          %s164 = ssub.s32 128, 128
          %165 = vsyncadd %s158, %s164
          %s166 = smul.addr %s24, 2
          %s167 = sadd.s32 %s162, %s166
          %s168 = smul.addr %s167, 128
          %s169 = scalar_lea.hbm %s1, %s168
          %s171 = sshll.u32 %s161, 4
          %s172 = int_to_ptr.vmem [resolvable:$true] %s171
          %174 = dma.hbm_to_vmem [thread:$0]  %s169, 128, %s172, %s158
        $region24: #{tpu_custom_call.1} parent=15 // pred_fallthru
          _
      $region16: #{tpu_custom_call.1} parent=5 // pred_fallthru
        _
      %p175 = scmp.le.s32.totalorder 1, %s17
      %p176 = scmp.lt.s32.totalorder %s17, 3
      %p177 = pnand %p175, %p176
      %p178 = pneg %p177
      // Predicated region
      $region25: #{tpu_custom_call.1} parent=5 // pred_check
        _
      $region26: #{tpu_custom_call.1} parent=5 // pred_check_branch
        %180 = sbr.rel (%p177) target = $region28
      $region27: #{tpu_custom_call.1} parent=5 // pred_region
        %s181 = ssub.s32 %s17, 1
        %s182 = sand.u32 %s44, 1
        %s183 = scalar_lea.sflag [#allocation3], %s182
        %s184 = sand.u32 %s44, 1
        %s185 = smul.addr %s184, 8
        %s186 = scalar_lea.vmem [#allocation2], %s185
        // Predicated region
        $region29: #{tpu_custom_call.1} parent=27 // pred_check
          %p187 = pneg %p57
        $region30: #{tpu_custom_call.1} parent=27 // pred_check_branch
          %189 = sbr.rel (%p187) target = $region32
        $region31: #{tpu_custom_call.1} parent=27 // pred_region
          %190 = dma.done %s183, 128
        $region32: #{tpu_custom_call.1} parent=27 // pred_fallthru
          _
        %s191 = sand.u32 %s74, 1
        %s192 = scalar_lea.sflag [#allocation6], %s191
        %s193 = sand.u32 %s74, 1
        %s194 = smul.addr %s193, 8
        %s195 = scalar_lea.vmem [#allocation5], %s194
        // Predicated region
        $region33: #{tpu_custom_call.1} parent=27 // pred_check
          %p196 = pneg %p87
        $region34: #{tpu_custom_call.1} parent=27 // pred_check_branch
          %198 = sbr.rel (%p196) target = $region36
        $region35: #{tpu_custom_call.1} parent=27 // pred_region
          %199 = dma.done %s192, 128
        $region36: #{tpu_custom_call.1} parent=27 // pred_fallthru
          _
        %s200 = sand.u32 %s44, 1
        %s201 = scalar_lea.sflag [#allocation3], %s200
        %s202 = sand.u32 %s44, 1
        %s203 = smul.addr %s202, 8
        %s204 = scalar_lea.vmem [#allocation2], %s203
        %p205 = pneg %p57
        %p206 = pneg %p54
        %s207 = sand.u32 %s74, 1
        %s208 = scalar_lea.sflag [#allocation6], %s207
        %s209 = sand.u32 %s74, 1
        %s210 = smul.addr %s209, 8
        %s211 = scalar_lea.vmem [#allocation5], %s210
        %p212 = pneg %p87
        %p213 = pneg %p84
        %p214 = pneg %p115
        %p215 = pneg %p112
        %s216 = sand.u32 %s102, 1
        %s217 = scalar_lea.sflag [#allocation4], %s216
        %s218 = sand.u32 %s102, 1
        %s219 = smul.addr %s218, 8
        %s220 = scalar_lea.vmem [#allocation7], %s219
        %s221 = sadd.s32 %s27, 1
        %v222 = vld [vmem:[%s186] sm:$0xff]
        %v223 = vld [vmem:[%s195] sm:$0xff]
        %v224 = vxor.u32 %v223, 2147483648
        %v225 = vmul.f32 %v224, 1.442695
        %v226 = vpow.pop %v225
        %v227 = vadd.f32 %v226, 1.0
        %v228 = vrcp.pop %v227
        %v229 = vmul.f32 1.0, %v228
        %v230 = vmul.f32 %v222, %v229
        %231 = vst [vmem:[%s220] sm:$0xff] %v230
        %s232 = sand.u32 %s102, 1
        %s233 = scalar_lea.sflag [#allocation4], %s232
        %s234 = sand.u32 %s102, 1
        %s235 = smul.addr %s234, 8
        %s236 = scalar_lea.vmem [#allocation7], %s235
        // Predicated region
        $region37: #{tpu_custom_call.1} parent=27 // pred_check
          %p237 = pneg %p112
        $region38: #{tpu_custom_call.1} parent=27 // pred_check_branch
          %239 = sbr.rel (%p237) target = $region40
        $region39: #{tpu_custom_call.1} parent=27 // pred_region
          %s241 = ssub.s32 128, 128
          %242 = vsyncadd %s233, %s241
          %s243 = sadd.s32 %s27, %s26
          %s244 = smul.addr %s243, 128
          %s245 = scalar_lea.hbm %s2, %s244
          %s247 = sshll.u32 %s236, 4
          %s248 = int_to_ptr.vmem [resolvable:$true] %s247
          %250 = dma.vmem_to_hbm [thread:$0]  %s248, 128, %s245, %s233
        $region40: #{tpu_custom_call.1} parent=27 // pred_fallthru
          _
      $region28: #{tpu_custom_call.1} parent=5 // pred_fallthru
        _
      %p251 = scmp.le.s32.totalorder 2, %s17
      // Predicated region
      $region41: #{tpu_custom_call.1} parent=5 // pred_check
        %p252 = pneg %p251
      $region42: #{tpu_custom_call.1} parent=5 // pred_check_branch
        %254 = sbr.rel (%p252) target = $region44
      $region43: #{tpu_custom_call.1} parent=5 // pred_region
        %s255 = ssub.s32 %s17, 2
        // Predicated region
        $region45: #{tpu_custom_call.1} parent=43 // pred_check
          %p256 = pneg %p118
        $region46: #{tpu_custom_call.1} parent=43 // pred_check_branch
          %258 = sbr.rel (%p256) target = $region48
        $region47: #{tpu_custom_call.1} parent=43 // pred_region
          %s259 = sand.u32 %s103, 1
          %s260 = scalar_lea.sflag [#allocation4], %s259
          %s261 = sand.u32 %s103, 1
          %s262 = smul.addr %s261, 8
          %s263 = scalar_lea.vmem [#allocation7], %s262
          %264 = dma.done %s260, 128
        $region48: #{tpu_custom_call.1} parent=43 // pred_fallthru
          _
      $region44: #{tpu_custom_call.1} parent=5 // pred_fallthru
        _
    $region6: #{tpu_custom_call.1} parent=1 // loop_footer
      %s21 = sadd.s32 1, %s17
    $region7: #{tpu_custom_call.1} parent=1 // loop_footer_branch
      %16 = sbr.rel target = $region3
    $region8: #{tpu_custom_call.1} parent=1 // loop_exit
      _
    %265 = vsyncpa [#allocation3], 1
    %s266 = scalar_lea.sflag [#allocation3], 1
    %267 = vsyncpa %s266, 1
    %268 = vsyncpa [#allocation6], 1
    %s269 = scalar_lea.sflag [#allocation6], 1
    %270 = vsyncpa %s269, 1
    %271 = vsyncpa [#allocation4], 1
    %s272 = scalar_lea.sflag [#allocation4], 1
    %273 = vsyncpa %s272, 1

</llo_original>
